<compile_context>
chip_gen: v6e
topology: v6e:2x2x1
jax: 0.10.0
libtpu: 0.0.40
codegen_flags: <defaults>
</compile_context>

<pallas_src>
import functools
import math

import numpy as np
import jax
import jax.numpy as jnp
from jax.experimental import pallas as pl
from jax.experimental.pallas import tpu as pltpu

LANE = 128        # feature (lane) padding granularity
SUBLANE = 16      # batch-tile granularity (safe for both f32 and bf16 tiles)
_MiB = 1024 * 1024


def _round_up(n, m):
    return ((n + m - 1) // m) * m


def _vmem_capacity_bytes():
    """Physical VMEM per TensorCore; conservative (v7x-sized) fallback."""
    try:
        return int(pltpu.get_tpu_info().vmem_capacity_bytes)
    except Exception:
        return 64 * _MiB


def _fused_mlp_kernel(x_ref, b_ref, *rest, num_layers, out_pads):
    """Whole MLP on one (block_b, in_pad) batch tile.

    rest = (w0_ref, ..., w{L-1}_ref, o_ref). Weights are (in_pad, out_pad), so
    each layer is one MXU matmul with f32 accumulation; bias add + ReLU run on
    the VPU and the inter-layer activation stays resident in VMEM/vregs.
    b_ref is the packed (L, max_out_pad) f32 bias table.
    """
    o_ref = rest[num_layers]
    h = x_ref[...]
    for i in range(num_layers):
        w_ref = rest[i]
        out_p = out_pads[i]
        y = jnp.dot(h, w_ref[...], preferred_element_type=jnp.float32)
        y = y + b_ref[i:i + 1, :out_p]          # (1, out_p) broadcasts over rows
        if i < num_layers - 1:
            h = jnp.maximum(y, 0.0).astype(w_ref.dtype)
        else:
            o_ref[...] = y.astype(o_ref.dtype)


def fused_mlp(x_pad, weights, bias_pack, *, block_b, out_dtype,
              single_buffer_weights, vmem_cap):
    """x_pad: (B_pad, in_pad); weights[i]: (d_i_pad, d_{i+1}_pad);
    bias_pack: (L, max_out_pad) f32."""
    B_pad, in_pad = x_pad.shape
    num_layers = len(weights)
    out_pads = tuple(int(w.shape[1]) for w in weights)
    out_pad = out_pads[-1]
    grid = (B_pad // block_b,)
    out_itemsize = int(np.dtype(out_dtype).itemsize)

    # Constant-index blocks (weights & packed biases) never change across the
    # batch grid -> single-buffer them to halve their VMEM residency.
    const_kwargs = {"pipeline_mode": pl.Buffered(1)} if single_buffer_weights else {}

    in_specs = [pl.BlockSpec((block_b, in_pad), lambda i: (i, 0)),
                pl.BlockSpec(bias_pack.shape, lambda i: (0, 0), **const_kwargs)]
    for w in weights:
        in_specs.append(pl.BlockSpec(w.shape, lambda i: (0, 0), **const_kwargs))
    out_spec = pl.BlockSpec((block_b, out_pad), lambda i: (i, 0))

    # ---- VMEM limit sized from the actual buffers (plus headroom) ----------
    wbuf = 1 if single_buffer_weights else 2
    w_bytes = sum(int(w.size) * int(w.dtype.itemsize) for w in weights) * wbuf
    b_bytes = _round_up(bias_pack.shape[0], 8) * bias_pack.shape[1] * 4 * wbuf
    io_bytes = (2 * block_b * in_pad * int(x_pad.dtype.itemsize)
                + 2 * block_b * out_pad * out_itemsize)
    act_bytes = 2 * block_b * max(out_pads) * 4        # intermediate headroom
    needed = w_bytes + b_bytes + io_bytes + act_bytes + 8 * _MiB
    vmem_limit = int(min(max(needed, 32 * _MiB), vmem_cap, 128 * _MiB))

    # ---- advisory cost estimate for XLA's scheduler -------------------------
    flops = 2 * B_pad * sum(int(w.shape[0]) * int(w.shape[1]) for w in weights)
    bytes_accessed = (sum(int(w.size) * int(w.dtype.itemsize) for w in weights)
                      + int(bias_pack.size) * 4
                      + int(x_pad.size) * int(x_pad.dtype.itemsize)
                      + B_pad * out_pad * out_itemsize)
    cost = pl.CostEstimate(flops=flops, transcendentals=0,
                           bytes_accessed=bytes_accessed)

    kernel = functools.partial(_fused_mlp_kernel,
                               num_layers=num_layers, out_pads=out_pads)

    return pl.pallas_call(
        kernel,
        out_shape=jax.ShapeDtypeStruct((B_pad, out_pad), out_dtype),
        grid_spec=pl.GridSpec(grid=grid, in_specs=in_specs, out_specs=out_spec),
        compiler_params=pltpu.CompilerParams(
            # Batch tiles are independent: shard across both TCs on v7x,
            # pipeline freely on v5e/v6e.
            dimension_semantics=("parallel",),
            vmem_limit_bytes=vmem_limit,
        ),
        cost_estimate=cost,
    )(x_pad, bias_pack, *weights)


class PallasNetwork:
    """JAX/Pallas equivalent of the PyTorch `Network` MLP (single fused kernel)."""

    def __init__(self, input_size, output_size, hidden_layers, key,
                 compute_dtype=jnp.float32):
        self.input_size = int(input_size)
        self.output_size = int(output_size)
        self.compute_dtype = compute_dtype

        dims = [self.input_size] + list(hidden_layers) + [self.output_size]
        self.dims = dims

        # PyTorch nn.Linear-style init; keep (out, in) weights for the reference.
        self.params = []
        for i in range(len(dims) - 1):
            fan_in, fan_out = dims[i], dims[i + 1]
            key, wk, bk = jax.random.split(key, 3)
            bound = 1.0 / math.sqrt(fan_in)
            w = jax.random.uniform(
                wk, (fan_out, fan_in), jnp.float32, minval=-bound, maxval=bound)
            b = jax.random.uniform(
                bk, (fan_out,), jnp.float32, minval=-bound, maxval=bound)
            self.params.append((w, b))

        # One-time glue: transpose to (in, out), zero-pad every feature dim up
        # to 128 lanes, cast weights to the compute dtype. Zero padding keeps
        # the math exact (padded inputs/outputs contribute/stay 0 through
        # every layer). Biases stay f32 (added after the f32 MXU accumulate)
        # and are packed into one (L, max_out_pad) table.
        # TODO(synk): on v6e/v7x with hidden dims >128 one could pad to 256
        # lanes to fully fill the 2x256 MXU; 128 is optimal for v5e.
        dims_pad = [_round_up(d, LANE) for d in dims]
        self.dims_pad = dims_pad
        self.padded_w = []
        for i, (w, _) in enumerate(self.params):
            in_p, out_p = dims_pad[i], dims_pad[i + 1]
            wt = jnp.zeros((in_p, out_p), jnp.float32)
            wt = wt.at[: w.shape[1], : w.shape[0]].set(w.T)
            self.padded_w.append(wt.astype(compute_dtype))

        max_out_pad = max(dims_pad[1:])
        bias_pack = jnp.zeros((len(self.params), max_out_pad), jnp.float32)
        for i, (_, b) in enumerate(self.params):
            bias_pack = bias_pack.at[i, : b.shape[0]].set(b)
        self.bias_pack = bias_pack

        self._vmem_cap = _vmem_capacity_bytes()
        self._single_buffer_ok = None   # resolved lazily with fallback

    # ------------------------------------------------------------------ utils
    def _pick_block_b(self, B):
        """Largest batch tile (multiple of 16) that fits the VMEM budget."""
        cdt_size = int(np.dtype(self.compute_dtype).itemsize)
        # Budget conservatively for the double-buffered-weights fallback.
        w_bytes = 2 * sum(int(w.size) * cdt_size for w in self.padded_w)
        b_bytes = 2 * _round_up(self.bias_pack.shape[0], 8) * self.bias_pack.shape[1] * 4
        budget = int(self._vmem_cap * 0.75) - w_bytes - b_bytes
        per_row = (2 * (self.dims_pad[0] * cdt_size + self.dims_pad[-1] * 4)
                   + 2 * max(self.dims_pad[1:]) * 4)       # intermediates headroom
        cap = budget // max(per_row, 1)
        cap = max(SUBLANE, min(1024, (cap // SUBLANE) * SUBLANE))
        return min(cap, _round_up(max(B, 1), SUBLANE))

    # ---------------------------------------------------------------- forward
    def __call__(self, x):
        B = x.shape[0]
        in_pad = self.dims_pad[0]
        out_pad = self.dims_pad[-1]
        block_b = self._pick_block_b(B)
        B_pad = _round_up(B, block_b)

        # Skip the wrapper HBM pad entirely when shapes are already aligned;
        # otherwise a single fused jnp.pad (no zeros + scatter round-trip).
        xc = x.astype(self.compute_dtype)
        if B_pad != B or in_pad != self.input_size:
            xc = jnp.pad(xc, ((0, B_pad - B), (0, in_pad - self.input_size)))

        tries = (True, False) if self._single_buffer_ok is not False else (False,)
        out, last_err = None, None
        for sb in tries:
            try:
                out = fused_mlp(
                    xc, self.padded_w, self.bias_pack,
                    block_b=block_b, out_dtype=jnp.float32,
                    single_buffer_weights=sb, vmem_cap=self._vmem_cap)
                out = jax.block_until_ready(out)
                self._single_buffer_ok = sb
                break
            except Exception as e:   # fall back to default double-buffering
                last_err, out = e, None
        if out is None:
            raise last_err

        if B_pad == B and out_pad == self.output_size:
            return out
        return out[:B, : self.output_size]


def reference_forward(params, x):
    """Pure-JAX reference mirroring the PyTorch forward."""
    n = len(params)
    for i, (w, b) in enumerate(params):
        x = x @ w.T + b
        if i < n - 1:
            x = jnp.maximum(x, 0.0)
    return x


if __name__ == "__main__":
    key = jax.random.PRNGKey(0)
    key, xk, pk = jax.random.split(key, 3)

    batch = 8
    input_size = 32
    hidden_layers = [64, 48]
    output_size = 16

    x = jax.random.normal(xk, (batch, input_size), jnp.float32)

    # f32 compute path: matches the pure-JAX reference tightly.
    net = PallasNetwork(input_size, output_size, hidden_layers, pk)
    out = jax.block_until_ready(net(x))
    ref = reference_forward(net.params, x)
    assert out.shape == (batch, output_size)
    assert jnp.allclose(out, ref, atol=1e-4, rtol=1e-4), "f32 mismatch vs reference"

    # bf16 compute path (MXU-friendly on v5e/v6e/v7x), f32 accumulation;
    # loosened tolerance per the bf16 rounding.
    net_bf16 = PallasNetwork(
        input_size, output_size, hidden_layers, pk, compute_dtype=jnp.bfloat16)
    out_bf16 = jax.block_until_ready(net_bf16(x))
    assert out_bf16.shape == (batch, output_size)
    assert jnp.allclose(out_bf16, ref, atol=5e-2, rtol=5e-2), "bf16 mismatch vs reference"

    # hidden_layers == [] branch of the PyTorch module (single Linear, no ReLU).
    net0 = PallasNetwork(input_size, output_size, [], pk)
    out0 = jax.block_until_ready(net0(x))
    ref0 = reference_forward(net0.params, x)
    assert jnp.allclose(out0, ref0, atol=1e-4, rtol=1e-4), "no-hidden mismatch vs reference"

    # Aligned fast path: B multiple of block_b and input already 128 lanes —
    # exercises the no-pad / no-slice wrapper branch.
    key, xk2, pk2 = jax.random.split(key, 3)
    xa = jax.random.normal(xk2, (16, 128), jnp.float32)
    net_a = PallasNetwork(128, 128, [256], pk2)
    out_a = jax.block_until_ready(net_a(xa))
    ref_a = reference_forward(net_a.params, xa)
    assert out_a.shape == (16, 128)
    assert jnp.allclose(out_a, ref_a, atol=1e-3, rtol=1e-3), "aligned-path mismatch vs reference"

    print("KERNEL_OK")
</pallas_src>

<mosaic_0001>
module attributes {stable_mosaic.version = 11 : i64} {
  func.func @_fused_mlp_kernel(%arg0: i32, %arg1: memref<16x128xf32, #tpu.memory_space<vmem>>, %arg2: memref<3x128xf32, #tpu.memory_space<vmem>>, %arg3: memref<128x128xf32, #tpu.memory_space<vmem>>, %arg4: memref<128x128xf32, #tpu.memory_space<vmem>>, %arg5: memref<128x128xf32, #tpu.memory_space<vmem>>, %arg6: memref<16x128xf32, #tpu.memory_space<vmem>>) attributes {dimension_semantics = [#tpu.dimension_semantics<parallel>], iteration_bounds = array<i64: 1>, scalar_prefetch = 0 : i64, scratch_operands = 0 : i64, tpu.core_type = #tpu.core_type<tc>, window_params = [{transform_indices = @transform_0, window_bounds = array<i64: 16, 128>}, {pipeline_mode = #tpu.pipeline_mode<synchronous>, transform_indices = @transform_1, window_bounds = array<i64: 3, 128>}, {pipeline_mode = #tpu.pipeline_mode<synchronous>, transform_indices = @transform_2, window_bounds = array<i64: 128, 128>}, {pipeline_mode = #tpu.pipeline_mode<synchronous>, transform_indices = @transform_3, window_bounds = array<i64: 128, 128>}, {pipeline_mode = #tpu.pipeline_mode<synchronous>, transform_indices = @transform_4, window_bounds = array<i64: 128, 128>}, {transform_indices = @transform_5, window_bounds = array<i64: 16, 128>}]} {
    %c0 = arith.constant 0 : index
    %c0_0 = arith.constant 0 : index
    %0 = vector.load %arg1[%c0, %c0_0] : memref<16x128xf32, #tpu.memory_space<vmem>>, vector<16x128xf32>
    %c0_1 = arith.constant 0 : index
    %c0_2 = arith.constant 0 : index
    %1 = vector.load %arg3[%c0_1, %c0_2] : memref<128x128xf32, #tpu.memory_space<vmem>>, vector<128x128xf32>
    %cst = arith.constant dense<0.000000e+00> : vector<16x128xf32>
    %2 = tpu.matmul %0, %1, %cst {dimension_numbers = #tpu.dot_dimension_numbers<[1], [0], [0], [1], [0, 0, 1, 1], [], []>} : vector<16x128xf32>, vector<128x128xf32>, vector<16x128xf32> -> vector<16x128xf32>
    %c0_3 = arith.constant 0 : index
    %c0_4 = arith.constant 0 : index
    %3 = vector.load %arg2[%c0_3, %c0_4] : memref<3x128xf32, #tpu.memory_space<vmem>>, vector<1x128xf32>
    %4 = vector.broadcast %3 : vector<1x128xf32> to vector<16x128xf32>
    %5 = arith.addf %2, %4 : vector<16x128xf32>
    %cst_5 = arith.constant 0.000000e+00 : f32
    %6 = vector.broadcast %cst_5 : f32 to vector<16x128xf32>
    %7 = arith.maximumf %5, %6 : vector<16x128xf32>
    %c0_6 = arith.constant 0 : index
    %c0_7 = arith.constant 0 : index
    %8 = vector.load %arg4[%c0_6, %c0_7] : memref<128x128xf32, #tpu.memory_space<vmem>>, vector<128x128xf32>
    %cst_8 = arith.constant dense<0.000000e+00> : vector<16x128xf32>
    %9 = tpu.matmul %7, %8, %cst_8 {dimension_numbers = #tpu.dot_dimension_numbers<[1], [0], [0], [1], [0, 0, 1, 1], [], []>} : vector<16x128xf32>, vector<128x128xf32>, vector<16x128xf32> -> vector<16x128xf32>
    %c1 = arith.constant 1 : index
    %c0_9 = arith.constant 0 : index
    %10 = vector.load %arg2[%c1, %c0_9] : memref<3x128xf32, #tpu.memory_space<vmem>>, vector<1x128xf32>
    %11 = vector.broadcast %10 : vector<1x128xf32> to vector<16x128xf32>
    %12 = arith.addf %9, %11 : vector<16x128xf32>
    %cst_10 = arith.constant 0.000000e+00 : f32
    %13 = vector.broadcast %cst_10 : f32 to vector<16x128xf32>
    %14 = arith.maximumf %12, %13 : vector<16x128xf32>
    %c0_11 = arith.constant 0 : index
    %c0_12 = arith.constant 0 : index
    %15 = vector.load %arg5[%c0_11, %c0_12] : memref<128x128xf32, #tpu.memory_space<vmem>>, vector<128x128xf32>
    %cst_13 = arith.constant dense<0.000000e+00> : vector<16x128xf32>
    %16 = tpu.matmul %14, %15, %cst_13 {dimension_numbers = #tpu.dot_dimension_numbers<[1], [0], [0], [1], [0, 0, 1, 1], [], []>} : vector<16x128xf32>, vector<128x128xf32>, vector<16x128xf32> -> vector<16x128xf32>
    %c2 = arith.constant 2 : index
    %c0_14 = arith.constant 0 : index
    %17 = vector.load %arg2[%c2, %c0_14] : memref<3x128xf32, #tpu.memory_space<vmem>>, vector<1x128xf32>
    %18 = vector.broadcast %17 : vector<1x128xf32> to vector<16x128xf32>
    %19 = arith.addf %16, %18 : vector<16x128xf32>
    %c0_15 = arith.constant 0 : index
    %c0_16 = arith.constant 0 : index
    %20 = vector.load %arg6[%c0_15, %c0_16] : memref<16x128xf32, #tpu.memory_space<vmem>>, vector<16x128xf32>
    tpu.vector_store %arg6[%c0_15, %c0_16], %19 {strides = array<i32>} : memref<16x128xf32, #tpu.memory_space<vmem>>, vector<16x128xf32>,
    return
  }
  func.func @transform_0(%arg0: i32) -> (i32, i32) {
    %c0_i32 = arith.constant 0 : i32
    %c0_i32_0 = arith.constant 0 : i32
    return %arg0, %c0_i32 : i32, i32
  }
  func.func @transform_1(%arg0: i32) -> (i32, i32) {
    %c0_i32 = arith.constant 0 : i32
    %c0_i32_0 = arith.constant 0 : i32
    %c0_i32_1 = arith.constant 0 : i32
    return %c0_i32, %c0_i32_0 : i32, i32
  }
  func.func @transform_2(%arg0: i32) -> (i32, i32) {
    %c0_i32 = arith.constant 0 : i32
    %c0_i32_0 = arith.constant 0 : i32
    %c0_i32_1 = arith.constant 0 : i32
    return %c0_i32, %c0_i32_0 : i32, i32
  }
  func.func @transform_3(%arg0: i32) -> (i32, i32) {
    %c0_i32 = arith.constant 0 : i32
    %c0_i32_0 = arith.constant 0 : i32
    %c0_i32_1 = arith.constant 0 : i32
    return %c0_i32, %c0_i32_0 : i32, i32
  }
  func.func @transform_4(%arg0: i32) -> (i32, i32) {
    %c0_i32 = arith.constant 0 : i32
    %c0_i32_0 = arith.constant 0 : i32
    %c0_i32_1 = arith.constant 0 : i32
    return %c0_i32, %c0_i32_0 : i32, i32
  }
  func.func @transform_5(%arg0: i32) -> (i32, i32) {
    %c0_i32 = arith.constant 0 : i32
    %c0_i32_0 = arith.constant 0 : i32
    return %arg0, %c0_i32 : i32, i32
  }
}

module attributes {stable_mosaic.version = 11 : i64} {
  func.func @_fused_mlp_kernel(%arg0: i32, %arg1: memref<16x128xf32, #tpu.memory_space<vmem>>, %arg2: memref<3x128xf32, #tpu.memory_space<vmem>>, %arg3: memref<128x128xf32, #tpu.memory_space<vmem>>, %arg4: memref<128x128xf32, #tpu.memory_space<vmem>>, %arg5: memref<128x128xf32, #tpu.memory_space<vmem>>, %arg6: memref<16x128xf32, #tpu.memory_space<vmem>>) attributes {dimension_semantics = [#tpu.dimension_semantics<parallel>], iteration_bounds = array<i64: 1>, scalar_prefetch = 0 : i64, scratch_operands = 0 : i64, tpu.core_type = #tpu.core_type<tc>, window_params = [{transform_indices = @transform_0, window_bounds = array<i64: 16, 128>}, {pipeline_mode = #tpu.pipeline_mode<synchronous>, transform_indices = @transform_1, window_bounds = array<i64: 3, 128>}, {pipeline_mode = #tpu.pipeline_mode<synchronous>, transform_indices = @transform_2, window_bounds = array<i64: 128, 128>}, {pipeline_mode = #tpu.pipeline_mode<synchronous>, transform_indices = @transform_3, window_bounds = array<i64: 128, 128>}, {pipeline_mode = #tpu.pipeline_mode<synchronous>, transform_indices = @transform_4, window_bounds = array<i64: 128, 128>}, {transform_indices = @transform_5, window_bounds = array<i64: 16, 128>}]} {
    %c0 = arith.constant 0 : index
    %c0_0 = arith.constant 0 : index
    %0 = vector.load %arg1[%c0, %c0_0] : memref<16x128xf32, #tpu.memory_space<vmem>>, vector<16x128xf32>
    %c0_1 = arith.constant 0 : index
    %c0_2 = arith.constant 0 : index
    %1 = vector.load %arg3[%c0_1, %c0_2] : memref<128x128xf32, #tpu.memory_space<vmem>>, vector<128x128xf32>
    %cst = arith.constant dense<0.000000e+00> : vector<16x128xf32>
    %2 = tpu.matmul %0, %1, %cst {dimension_numbers = #tpu.dot_dimension_numbers<[1], [0], [0], [1], [0, 0, 1, 1], [], []>} : vector<16x128xf32>, vector<128x128xf32>, vector<16x128xf32> -> vector<16x128xf32>
    %c0_3 = arith.constant 0 : index
    %c0_4 = arith.constant 0 : index
    %3 = vector.load %arg2[%c0_3, %c0_4] : memref<3x128xf32, #tpu.memory_space<vmem>>, vector<1x128xf32>
    %4 = vector.broadcast %3 : vector<1x128xf32> to vector<16x128xf32>
    %5 = arith.addf %2, %4 : vector<16x128xf32>
    %cst_5 = arith.constant 0.000000e+00 : f32
    %6 = vector.broadcast %cst_5 : f32 to vector<16x128xf32>
    %7 = arith.maximumf %5, %6 : vector<16x128xf32>
    %c0_6 = arith.constant 0 : index
    %c0_7 = arith.constant 0 : index
    %8 = vector.load %arg4[%c0_6, %c0_7] : memref<128x128xf32, #tpu.memory_space<vmem>>, vector<128x128xf32>
    %cst_8 = arith.constant dense<0.000000e+00> : vector<16x128xf32>
    %9 = tpu.matmul %7, %8, %cst_8 {dimension_numbers = #tpu.dot_dimension_numbers<[1], [0], [0], [1], [0, 0, 1, 1], [], []>} : vector<16x128xf32>, vector<128x128xf32>, vector<16x128xf32> -> vector<16x128xf32>
    %c1 = arith.constant 1 : index
    %c0_9 = arith.constant 0 : index
    %10 = vector.load %arg2[%c1, %c0_9] : memref<3x128xf32, #tpu.memory_space<vmem>>, vector<1x128xf32>
    %11 = vector.broadcast %10 : vector<1x128xf32> to vector<16x128xf32>
    %12 = arith.addf %9, %11 : vector<16x128xf32>
    %cst_10 = arith.constant 0.000000e+00 : f32
    %13 = vector.broadcast %cst_10 : f32 to vector<16x128xf32>
    %14 = arith.maximumf %12, %13 : vector<16x128xf32>
    %c0_11 = arith.constant 0 : index
    %c0_12 = arith.constant 0 : index
    %15 = vector.load %arg5[%c0_11, %c0_12] : memref<128x128xf32, #tpu.memory_space<vmem>>, vector<128x128xf32>
    %cst_13 = arith.constant dense<0.000000e+00> : vector<16x128xf32>
    %16 = tpu.matmul %14, %15, %cst_13 {dimension_numbers = #tpu.dot_dimension_numbers<[1], [0], [0], [1], [0, 0, 1, 1], [], []>} : vector<16x128xf32>, vector<128x128xf32>, vector<16x128xf32> -> vector<16x128xf32>
    %c2 = arith.constant 2 : index
    %c0_14 = arith.constant 0 : index
    %17 = vector.load %arg2[%c2, %c0_14] : memref<3x128xf32, #tpu.memory_space<vmem>>, vector<1x128xf32>
    %18 = vector.broadcast %17 : vector<1x128xf32> to vector<16x128xf32>
    %19 = arith.addf %16, %18 : vector<16x128xf32>
    %c0_15 = arith.constant 0 : index
    %c0_16 = arith.constant 0 : index
    %20 = vector.load %arg6[%c0_15, %c0_16] : memref<16x128xf32, #tpu.memory_space<vmem>>, vector<16x128xf32>
    tpu.vector_store %arg6[%c0_15, %c0_16], %19 {strides = array<i32>} : memref<16x128xf32, #tpu.memory_space<vmem>>, vector<16x128xf32>,
    return
  }
  func.func @transform_0(%arg0: i32) -> (i32, i32) {
    %c0_i32 = arith.constant 0 : i32
    %c0_i32_0 = arith.constant 0 : i32
    return %arg0, %c0_i32 : i32, i32
  }
  func.func @transform_1(%arg0: i32) -> (i32, i32) {
    %c0_i32 = arith.constant 0 : i32
    %c0_i32_0 = arith.constant 0 : i32
    %c0_i32_1 = arith.constant 0 : i32
    return %c0_i32, %c0_i32_0 : i32, i32
  }
  func.func @transform_2(%arg0: i32) -> (i32, i32) {
    %c0_i32 = arith.constant 0 : i32
    %c0_i32_0 = arith.constant 0 : i32
    %c0_i32_1 = arith.constant 0 : i32
    return %c0_i32, %c0_i32_0 : i32, i32
  }
  func.func @transform_3(%arg0: i32) -> (i32, i32) {
    %c0_i32 = arith.constant 0 : i32
    %c0_i32_0 = arith.constant 0 : i32
    %c0_i32_1 = arith.constant 0 : i32
    return %c0_i32, %c0_i32_0 : i32, i32
  }
  func.func @transform_4(%arg0: i32) -> (i32, i32) {
    %c0_i32 = arith.constant 0 : i32
    %c0_i32_0 = arith.constant 0 : i32
    %c0_i32_1 = arith.constant 0 : i32
    return %c0_i32, %c0_i32_0 : i32, i32
  }
  func.func @transform_5(%arg0: i32) -> (i32, i32) {
    %c0_i32 = arith.constant 0 : i32
    %c0_i32_0 = arith.constant 0 : i32
    return %arg0, %c0_i32 : i32, i32
  }
}

</mosaic_0001>

<llo_original>
// kernel: tpu_custom_call.1
$region0: #{tpu_custom_call.1}
  #allocation0 [shape = 'u32[]', space=smem, size = 0x4, offset = 0x4, fixed_abs, tag = 'smem constant byte address 0x4 - core index']
  #allocation1 [shape = 'u32[144,128]{1,0:T(1,128)}', space=vmem, size = 0x12000, scoped, tag = 'internal scratch']
  %s0 = inlined_call_operand.hbm [shape: f32[16,128], index: 0, kind: input, shape index: {}]
  %s1 = inlined_call_operand.hbm [shape: f32[3,128], index: 1, kind: input, shape index: {}]
  %s2 = inlined_call_operand.hbm [shape: f32[128,128], index: 2, kind: input, shape index: {}]
  %s3 = inlined_call_operand.hbm [shape: f32[128,128], index: 3, kind: input, shape index: {}]
  %s4 = inlined_call_operand.hbm [shape: f32[128,128], index: 4, kind: input, shape index: {}]
  %s5 = inlined_call_operand.hbm [shape: f32[16,128], index: 5, kind: output, shape index: {}]
  %s6 = sld [smem:[#allocation0]]
  $region50: #{tpu_custom_call.1} parent=0
    _
  %s8 = ssub.s32 1, %s6
  %s9 = scalar_select 0, %s8, %s6
  $region1: #{tpu_custom_call.1} parent=0
    #allocation2 [shape = 'u8[8192]{0}', space=vmem, size = 0x2000, scoped, tag = 'input window, operand 0, single buffered']
    #allocation3 [shape = 's32[1]{0}', space=sflag, size = 0x4, scoped, tag = 'scoped memory for tpu_custom_call.1']
    #allocation4 [shape = 's32[1]{0}', space=sflag, size = 0x4, scoped, tag = 'scoped memory for tpu_custom_call.1']
    #allocation5 [shape = 'u8[2048]{0}', space=vmem, size = 0x800, scoped, tag = 'input window, operand 1, single buffered']
    #allocation6 [shape = 's32[1]{0}', space=sflag, size = 0x4, scoped, tag = 'scoped memory for tpu_custom_call.1']
    #allocation7 [shape = 'u8[65536]{0}', space=vmem, size = 0x10000, scoped, tag = 'input window, operand 2, single buffered']
    #allocation8 [shape = 'u8[65536]{0}', space=vmem, size = 0x10000, scoped, tag = 'input window, operand 3, single buffered']
    #allocation9 [shape = 's32[1]{0}', space=sflag, size = 0x4, scoped, tag = 'scoped memory for tpu_custom_call.1']
    #allocation10 [shape = 'u8[65536]{0}', space=vmem, size = 0x10000, scoped, tag = 'input window, operand 4, single buffered']
    #allocation11 [shape = 'u8[8192]{0}', space=vmem, size = 0x2000, scoped, tag = 'output window, operand 0, single buffered']
    %10 = vsyncpa [#allocation3], 0
    %11 = vsyncpa [#allocation6], 0
    %12 = vsyncpa [#allocation9], 0
    %13 = vsyncpa [#allocation4], 0
    // Predicated region
    $region2: #{tpu_custom_call.1} parent=1 // pred_check
      _
    $region3: #{tpu_custom_call.1} parent=1 // pred_check_branch
      %15 = sbr.rel (0) target = $region5
    $region4: #{tpu_custom_call.1} parent=1 // pred_region
      %s17 = ssub.s32 256, 256
      %18 = vsyncadd [#allocation3], %s17
      %s19 = sshll.u32 [#allocation2], 4
      %s20 = int_to_ptr.vmem [resolvable:$true] %s19
      %25 = dma.hbm_to_vmem [thread:$0]  %s0, 256, %s20, [#allocation3], 128, 128, 8
    $region5: #{tpu_custom_call.1} parent=1 // pred_fallthru
      _
    // Predicated region
    $region6: #{tpu_custom_call.1} parent=1 // pred_check
      _
    $region7: #{tpu_custom_call.1} parent=1 // pred_check_branch
      %27 = sbr.rel (0) target = $region9
    $region8: #{tpu_custom_call.1} parent=1 // pred_region
      %s29 = ssub.s32 64, 64
      %30 = vsyncadd [#allocation6], %s29
      %s32 = sshll.u32 [#allocation5], 4
      %s33 = int_to_ptr.vmem [resolvable:$true] %s32
      %35 = dma.hbm_to_vmem [thread:$0]  %s1, 64, %s33, [#allocation6]
    $region9: #{tpu_custom_call.1} parent=1 // pred_fallthru
      _
    // Predicated region
    $region10: #{tpu_custom_call.1} parent=1 // pred_check
      _
    $region11: #{tpu_custom_call.1} parent=1 // pred_check_branch
      %37 = sbr.rel (0) target = $region13
    $region12: #{tpu_custom_call.1} parent=1 // pred_region
      %s39 = ssub.s32 2048, 2048
      %40 = vsyncadd [#allocation6], %s39
      %s41 = sshll.u32 [#allocation7], 4
      %s42 = int_to_ptr.vmem [resolvable:$true] %s41
      %47 = dma.hbm_to_vmem [thread:$0]  %s2, 2048, %s42, [#allocation6], 128, 128, 8
    $region13: #{tpu_custom_call.1} parent=1 // pred_fallthru
      _
    // Predicated region
    $region14: #{tpu_custom_call.1} parent=1 // pred_check
      _
    $region15: #{tpu_custom_call.1} parent=1 // pred_check_branch
      %49 = sbr.rel (0) target = $region17
    $region16: #{tpu_custom_call.1} parent=1 // pred_region
      %s51 = ssub.s32 2048, 2048
      %52 = vsyncadd [#allocation9], %s51
      %s53 = sshll.u32 [#allocation8], 4
      %s54 = int_to_ptr.vmem [resolvable:$true] %s53
      %59 = dma.hbm_to_vmem [thread:$0]  %s3, 2048, %s54, [#allocation9], 128, 128, 8
    $region17: #{tpu_custom_call.1} parent=1 // pred_fallthru
      _
    // Predicated region
    $region18: #{tpu_custom_call.1} parent=1 // pred_check
      _
    $region19: #{tpu_custom_call.1} parent=1 // pred_check_branch
      %61 = sbr.rel (0) target = $region21
    $region20: #{tpu_custom_call.1} parent=1 // pred_region
      %s63 = ssub.s32 2048, 2048
      %64 = vsyncadd [#allocation9], %s63
      %s65 = sshll.u32 [#allocation10], 4
      %s66 = int_to_ptr.vmem [resolvable:$true] %s65
      %71 = dma.hbm_to_vmem [thread:$0]  %s4, 2048, %s66, [#allocation9], 128, 128, 8
    $region21: #{tpu_custom_call.1} parent=1 // pred_fallthru
      _
    // Predicated region
    $region22: #{tpu_custom_call.1} parent=1 // pred_check
      _
    $region23: #{tpu_custom_call.1} parent=1 // pred_check_branch
      %73 = sbr.rel (0) target = $region25
    $region24: #{tpu_custom_call.1} parent=1 // pred_region
      %74 = dma.done [#allocation3], 256
    $region25: #{tpu_custom_call.1} parent=1 // pred_fallthru
      _
    // Predicated region
    $region26: #{tpu_custom_call.1} parent=1 // pred_check
      _
    $region27: #{tpu_custom_call.1} parent=1 // pred_check_branch
      %76 = sbr.rel (0) target = $region29
    $region28: #{tpu_custom_call.1} parent=1 // pred_region
      %77 = dma.done [#allocation6], 64
    $region29: #{tpu_custom_call.1} parent=1 // pred_fallthru
      _
    // Predicated region
    $region30: #{tpu_custom_call.1} parent=1 // pred_check
      _
    $region31: #{tpu_custom_call.1} parent=1 // pred_check_branch
      %79 = sbr.rel (0) target = $region33
    $region32: #{tpu_custom_call.1} parent=1 // pred_region
      %80 = dma.done [#allocation6], 2048
    $region33: #{tpu_custom_call.1} parent=1 // pred_fallthru
      _
    // Predicated region
    $region34: #{tpu_custom_call.1} parent=1 // pred_check
      _
    $region35: #{tpu_custom_call.1} parent=1 // pred_check_branch
      %82 = sbr.rel (0) target = $region37
    $region36: #{tpu_custom_call.1} parent=1 // pred_region
      %83 = dma.done [#allocation9], 2048
    $region37: #{tpu_custom_call.1} parent=1 // pred_fallthru
      _
    // Predicated region
    $region38: #{tpu_custom_call.1} parent=1 // pred_check
      _
    $region39: #{tpu_custom_call.1} parent=1 // pred_check_branch
      %85 = sbr.rel (0) target = $region41
    $region40: #{tpu_custom_call.1} parent=1 // pred_region
      %86 = dma.done [#allocation9], 2048
    $region41: #{tpu_custom_call.1} parent=1 // pred_fallthru
      _
    %v87 = vld [vmem:[#allocation2] sm:$0xff]
    %v88 = vld [vmem:[#allocation2 + $0x8] sm:$0xff]
    %v89 = vld [vmem:[#allocation7] sm:$0xff]
    %v90 = vld [vmem:[#allocation7 + $0x8] sm:$0xff]
    %v91 = vld [vmem:[#allocation7 + $0x10] sm:$0xff]
    %v92 = vld [vmem:[#allocation7 + $0x18] sm:$0xff]
    %v93 = vld [vmem:[#allocation7 + $0x20] sm:$0xff]
    %v94 = vld [vmem:[#allocation7 + $0x28] sm:$0xff]
    %v95 = vld [vmem:[#allocation7 + $0x30] sm:$0xff]
    %v96 = vld [vmem:[#allocation7 + $0x38] sm:$0xff]
    %v97 = vld [vmem:[#allocation7 + $0x40] sm:$0xff]
    %v98 = vld [vmem:[#allocation7 + $0x48] sm:$0xff]
    %v99 = vld [vmem:[#allocation7 + $0x50] sm:$0xff]
    %v100 = vld [vmem:[#allocation7 + $0x58] sm:$0xff]
    %v101 = vld [vmem:[#allocation7 + $0x60] sm:$0xff]
    %v102 = vld [vmem:[#allocation7 + $0x68] sm:$0xff]
    %v103 = vld [vmem:[#allocation7 + $0x70] sm:$0xff]
    %v104 = vld [vmem:[#allocation7 + $0x78] sm:$0xff]
    %v105 = vld [vmem:[#allocation5] sm:$0x1]
    %v106 = vlaneseq
    %v107 = vshrl.u32 %v106, 7
    %v108 = vsub.s32 0, %v107
    %v109 = vrot.slane %v105, %v108
    %110 = vmatprep.subr.mxu0 0.0
    %111 = vmatpush1.msra.mxu0 %v104
    %112 = vmatprep.subr.mxu0 0.0
    %113 = vmatpush1.msra.mxu0 %v103
    %114 = vmatprep.subr.mxu0 0.0
    %115 = vmatpush1.msra.mxu0 %v102
    %116 = vmatprep.subr.mxu0 0.0
    %117 = vmatpush1.msra.mxu0 %v101
    %118 = vmatprep.subr.mxu0 0.0
    %119 = vmatpush1.msra.mxu0 %v100
    %120 = vmatprep.subr.mxu0 0.0
    %121 = vmatpush1.msra.mxu0 %v99
    %122 = vmatprep.subr.mxu0 0.0
    %123 = vmatpush1.msra.mxu0 %v98
    %124 = vmatprep.subr.mxu0 0.0
    %125 = vmatpush1.msra.mxu0 %v97
    %126 = vmatprep.subr.mxu0 0.0
    %127 = vmatpush1.msra.mxu0 %v96
    %128 = vmatprep.subr.mxu0 0.0
    %129 = vmatpush1.msra.mxu0 %v95
    %130 = vmatprep.subr.mxu0 0.0
    %131 = vmatpush1.msra.mxu0 %v94
    %132 = vmatprep.subr.mxu0 0.0
    %133 = vmatpush1.msra.mxu0 %v93
    %134 = vmatprep.subr.mxu0 0.0
    %135 = vmatpush1.msra.mxu0 %v92
    %136 = vmatprep.subr.mxu0 0.0
    %137 = vmatpush1.msra.mxu0 %v91
    %138 = vmatprep.subr.mxu0 0.0
    %139 = vmatpush1.msra.mxu0 %v90
    %140 = vmatprep.subr.mxu0 0.0
    %141 = vmatpush1.msra.mxu0 %v89
    %142 = vmatprep.subr.mxu0 0.0
    %143 = vmatpush2.msra.mxu0 0.0
    %144 = vmatprep.subr.mxu0 0.0
    %145 = vmatpush2.msra.mxu0 0.0
    %146 = vmatprep.subr.mxu0 0.0
    %147 = vmatpush2.msra.mxu0 0.0
    %148 = vmatprep.subr.mxu0 0.0
    %149 = vmatpush2.msra.mxu0 0.0
    %150 = vmatprep.subr.mxu0 0.0
    %151 = vmatpush2.msra.mxu0 0.0
    %152 = vmatprep.subr.mxu0 0.0
    %153 = vmatpush2.msra.mxu0 0.0
    %154 = vmatprep.subr.mxu0 0.0
    %155 = vmatpush2.msra.mxu0 0.0
    %156 = vmatprep.subr.mxu0 0.0
    %157 = vmatpush2.msra.mxu0 0.0
    %158 = vmatprep.subr.mxu0 0.0
    %159 = vmatpush2.msra.mxu0 0.0
    %160 = vmatprep.subr.mxu0 0.0
    %161 = vmatpush2.msra.mxu0 0.0
    %162 = vmatprep.subr.mxu0 0.0
    %163 = vmatpush2.msra.mxu0 0.0
    %164 = vmatprep.subr.mxu0 0.0
    %165 = vmatpush2.msra.mxu0 0.0
    %166 = vmatprep.subr.mxu0 0.0
    %167 = vmatpush2.msra.mxu0 0.0
    %168 = vmatprep.subr.mxu0 0.0
    %169 = vmatpush2.msra.mxu0 0.0
    %170 = vmatprep.subr.mxu0 0.0
    %171 = vmatpush2.msra.mxu0 0.0
    %172 = vmatprep.subr.mxu0 0.0
    %173 = vmatpush2.msra.mxu0 0.0
    %174 = vmatprep.mubr.f32.mxu0 0.0
    %175 = vmatmul.mubr.f32.gmra.mxu0 %v87
    %v176 = vpop.f32.mrf.mxu0
    %v177 = vadd.f32 %v109, %v176
    %v178 = vpop.f32.mrf.mxu0
    %179 = vmatprep.mubr.f32.mxu0 0.0
    %180 = vmatmul.mubr.f32.gmra.mxu0 %v88
    %v181 = vpop.f32.mrf.mxu0
    %v182 = vadd.f32 %v109, %v181
    %v183 = vpop.f32.mrf.mxu0
    %184 = vdwg.mxu0
    %v185 = vmax.f32 %v177, 0.0
    %v186 = vmax.f32 %v182, 0.0
    %v187 = vld [vmem:[#allocation8] sm:$0xff]
    %v188 = vld [vmem:[#allocation8 + $0x8] sm:$0xff]
    %v189 = vld [vmem:[#allocation8 + $0x10] sm:$0xff]
    %v190 = vld [vmem:[#allocation8 + $0x18] sm:$0xff]
    %v191 = vld [vmem:[#allocation8 + $0x20] sm:$0xff]
    %v192 = vld [vmem:[#allocation8 + $0x28] sm:$0xff]
    %v193 = vld [vmem:[#allocation8 + $0x30] sm:$0xff]
    %v194 = vld [vmem:[#allocation8 + $0x38] sm:$0xff]
    %v195 = vld [vmem:[#allocation8 + $0x40] sm:$0xff]
    %v196 = vld [vmem:[#allocation8 + $0x48] sm:$0xff]
    %v197 = vld [vmem:[#allocation8 + $0x50] sm:$0xff]
    %v198 = vld [vmem:[#allocation8 + $0x58] sm:$0xff]
    %v199 = vld [vmem:[#allocation8 + $0x60] sm:$0xff]
    %v200 = vld [vmem:[#allocation8 + $0x68] sm:$0xff]
    %v201 = vld [vmem:[#allocation8 + $0x70] sm:$0xff]
    %v202 = vld [vmem:[#allocation8 + $0x78] sm:$0xff]
    %v203 = vld [vmem:[#allocation5 + $0x1] sm:$0x1]
    %v204 = vlaneseq
    %v205 = vshrl.u32 %v204, 7
    %v206 = vsub.s32 0, %v205
    %v207 = vrot.slane %v203, %v206
    %208 = vmatprep.subr.mxu0 0.0
    %209 = vmatpush1.msra.mxu0 %v202
    %210 = vmatprep.subr.mxu0 0.0
    %211 = vmatpush1.msra.mxu0 %v201
    %212 = vmatprep.subr.mxu0 0.0
    %213 = vmatpush1.msra.mxu0 %v200
    %214 = vmatprep.subr.mxu0 0.0
    %215 = vmatpush1.msra.mxu0 %v199
    %216 = vmatprep.subr.mxu0 0.0
    %217 = vmatpush1.msra.mxu0 %v198
    %218 = vmatprep.subr.mxu0 0.0
    %219 = vmatpush1.msra.mxu0 %v197
    %220 = vmatprep.subr.mxu0 0.0
    %221 = vmatpush1.msra.mxu0 %v196
    %222 = vmatprep.subr.mxu0 0.0
    %223 = vmatpush1.msra.mxu0 %v195
    %224 = vmatprep.subr.mxu0 0.0
    %225 = vmatpush1.msra.mxu0 %v194
    %226 = vmatprep.subr.mxu0 0.0
    %227 = vmatpush1.msra.mxu0 %v193
    %228 = vmatprep.subr.mxu0 0.0
    %229 = vmatpush1.msra.mxu0 %v192
    %230 = vmatprep.subr.mxu0 0.0
    %231 = vmatpush1.msra.mxu0 %v191
    %232 = vmatprep.subr.mxu0 0.0
    %233 = vmatpush1.msra.mxu0 %v190
    %234 = vmatprep.subr.mxu0 0.0
    %235 = vmatpush1.msra.mxu0 %v189
    %236 = vmatprep.subr.mxu0 0.0
    %237 = vmatpush1.msra.mxu0 %v188
    %238 = vmatprep.subr.mxu0 0.0
    %239 = vmatpush1.msra.mxu0 %v187
    %240 = vmatprep.subr.mxu0 0.0
    %241 = vmatpush2.msra.mxu0 0.0
    %242 = vmatprep.subr.mxu0 0.0
    %243 = vmatpush2.msra.mxu0 0.0
    %244 = vmatprep.subr.mxu0 0.0
    %245 = vmatpush2.msra.mxu0 0.0
    %246 = vmatprep.subr.mxu0 0.0
    %247 = vmatpush2.msra.mxu0 0.0
    %248 = vmatprep.subr.mxu0 0.0
    %249 = vmatpush2.msra.mxu0 0.0
    %250 = vmatprep.subr.mxu0 0.0
    %251 = vmatpush2.msra.mxu0 0.0
    %252 = vmatprep.subr.mxu0 0.0
    %253 = vmatpush2.msra.mxu0 0.0
    %254 = vmatprep.subr.mxu0 0.0
    %255 = vmatpush2.msra.mxu0 0.0
    %256 = vmatprep.subr.mxu0 0.0
    %257 = vmatpush2.msra.mxu0 0.0
    %258 = vmatprep.subr.mxu0 0.0
    %259 = vmatpush2.msra.mxu0 0.0
    %260 = vmatprep.subr.mxu0 0.0
    %261 = vmatpush2.msra.mxu0 0.0
    %262 = vmatprep.subr.mxu0 0.0
    %263 = vmatpush2.msra.mxu0 0.0
    %264 = vmatprep.subr.mxu0 0.0
    %265 = vmatpush2.msra.mxu0 0.0
    %266 = vmatprep.subr.mxu0 0.0
    %267 = vmatpush2.msra.mxu0 0.0
    %268 = vmatprep.subr.mxu0 0.0
    %269 = vmatpush2.msra.mxu0 0.0
    %270 = vmatprep.subr.mxu0 0.0
    %271 = vmatpush2.msra.mxu0 0.0
    %272 = vmatprep.mubr.f32.mxu0 0.0
    %273 = vmatmul.mubr.f32.gmra.mxu0 %v185
    %v274 = vpop.f32.mrf.mxu0
    %v275 = vadd.f32 %v207, %v274
    %v276 = vpop.f32.mrf.mxu0
    %277 = vmatprep.mubr.f32.mxu0 0.0
    %278 = vmatmul.mubr.f32.gmra.mxu0 %v186
    %v279 = vpop.f32.mrf.mxu0
    %v280 = vadd.f32 %v207, %v279
    %v281 = vpop.f32.mrf.mxu0
    %282 = vdwg.mxu0
    %v283 = vmax.f32 %v275, 0.0
    %v284 = vmax.f32 %v280, 0.0
    %v285 = vld [vmem:[#allocation10] sm:$0xff]
    %v286 = vld [vmem:[#allocation10 + $0x8] sm:$0xff]
    %v287 = vld [vmem:[#allocation10 + $0x10] sm:$0xff]
    %v288 = vld [vmem:[#allocation10 + $0x18] sm:$0xff]
    %v289 = vld [vmem:[#allocation10 + $0x20] sm:$0xff]
    %v290 = vld [vmem:[#allocation10 + $0x28] sm:$0xff]
    %v291 = vld [vmem:[#allocation10 + $0x30] sm:$0xff]
    %v292 = vld [vmem:[#allocation10 + $0x38] sm:$0xff]
    %v293 = vld [vmem:[#allocation10 + $0x40] sm:$0xff]
    %v294 = vld [vmem:[#allocation10 + $0x48] sm:$0xff]
    %v295 = vld [vmem:[#allocation10 + $0x50] sm:$0xff]
    %v296 = vld [vmem:[#allocation10 + $0x58] sm:$0xff]
    %v297 = vld [vmem:[#allocation10 + $0x60] sm:$0xff]
    %v298 = vld [vmem:[#allocation10 + $0x68] sm:$0xff]
    %v299 = vld [vmem:[#allocation10 + $0x70] sm:$0xff]
    %v300 = vld [vmem:[#allocation10 + $0x78] sm:$0xff]
    %v301 = vld [vmem:[#allocation5 + $0x2] sm:$0x1]
    %v302 = vlaneseq
    %v303 = vshrl.u32 %v302, 7
    %v304 = vsub.s32 0, %v303
    %v305 = vrot.slane %v301, %v304
    %306 = vmatprep.subr.mxu0 0.0
    %307 = vmatpush1.msra.mxu0 %v300
    %308 = vmatprep.subr.mxu0 0.0
    %309 = vmatpush1.msra.mxu0 %v299
    %310 = vmatprep.subr.mxu0 0.0
    %311 = vmatpush1.msra.mxu0 %v298
    %312 = vmatprep.subr.mxu0 0.0
    %313 = vmatpush1.msra.mxu0 %v297
    %314 = vmatprep.subr.mxu0 0.0
    %315 = vmatpush1.msra.mxu0 %v296
    %316 = vmatprep.subr.mxu0 0.0
    %317 = vmatpush1.msra.mxu0 %v295
    %318 = vmatprep.subr.mxu0 0.0
    %319 = vmatpush1.msra.mxu0 %v294
    %320 = vmatprep.subr.mxu0 0.0
    %321 = vmatpush1.msra.mxu0 %v293
    %322 = vmatprep.subr.mxu0 0.0
    %323 = vmatpush1.msra.mxu0 %v292
    %324 = vmatprep.subr.mxu0 0.0
    %325 = vmatpush1.msra.mxu0 %v291
    %326 = vmatprep.subr.mxu0 0.0
    %327 = vmatpush1.msra.mxu0 %v290
    %328 = vmatprep.subr.mxu0 0.0
    %329 = vmatpush1.msra.mxu0 %v289
    %330 = vmatprep.subr.mxu0 0.0
    %331 = vmatpush1.msra.mxu0 %v288
    %332 = vmatprep.subr.mxu0 0.0
    %333 = vmatpush1.msra.mxu0 %v287
    %334 = vmatprep.subr.mxu0 0.0
    %335 = vmatpush1.msra.mxu0 %v286
    %336 = vmatprep.subr.mxu0 0.0
    %337 = vmatpush1.msra.mxu0 %v285
    %338 = vmatprep.subr.mxu0 0.0
    %339 = vmatpush2.msra.mxu0 0.0
    %340 = vmatprep.subr.mxu0 0.0
    %341 = vmatpush2.msra.mxu0 0.0
    %342 = vmatprep.subr.mxu0 0.0
    %343 = vmatpush2.msra.mxu0 0.0
    %344 = vmatprep.subr.mxu0 0.0
    %345 = vmatpush2.msra.mxu0 0.0
    %346 = vmatprep.subr.mxu0 0.0
    %347 = vmatpush2.msra.mxu0 0.0
    %348 = vmatprep.subr.mxu0 0.0
    %349 = vmatpush2.msra.mxu0 0.0
    %350 = vmatprep.subr.mxu0 0.0
    %351 = vmatpush2.msra.mxu0 0.0
    %352 = vmatprep.subr.mxu0 0.0
    %353 = vmatpush2.msra.mxu0 0.0
    %354 = vmatprep.subr.mxu0 0.0
    %355 = vmatpush2.msra.mxu0 0.0
    %356 = vmatprep.subr.mxu0 0.0
    %357 = vmatpush2.msra.mxu0 0.0
    %358 = vmatprep.subr.mxu0 0.0
    %359 = vmatpush2.msra.mxu0 0.0
    %360 = vmatprep.subr.mxu0 0.0
    %361 = vmatpush2.msra.mxu0 0.0
    %362 = vmatprep.subr.mxu0 0.0
    %363 = vmatpush2.msra.mxu0 0.0
    %364 = vmatprep.subr.mxu0 0.0
    %365 = vmatpush2.msra.mxu0 0.0
    %366 = vmatprep.subr.mxu0 0.0
    %367 = vmatpush2.msra.mxu0 0.0
    %368 = vmatprep.subr.mxu0 0.0
    %369 = vmatpush2.msra.mxu0 0.0
    %370 = vmatprep.mubr.f32.mxu0 0.0
    %371 = vmatmul.mubr.f32.gmra.mxu0 %v283
    %v372 = vpop.f32.mrf.mxu0
    %v373 = vadd.f32 %v305, %v372
    %v374 = vpop.f32.mrf.mxu0
    %375 = vmatprep.mubr.f32.mxu0 0.0
    %376 = vmatmul.mubr.f32.gmra.mxu0 %v284
    %v377 = vpop.f32.mrf.mxu0
    %v378 = vadd.f32 %v305, %v377
    %v379 = vpop.f32.mrf.mxu0
    %380 = vdwg.mxu0
    %381 = vst [vmem:[#allocation11] sm:$0xff] %v373
    %382 = vst [vmem:[#allocation11 + $0x8] sm:$0xff] %v378
    // Predicated region
    $region42: #{tpu_custom_call.1} parent=1 // pred_check
      _
    $region43: #{tpu_custom_call.1} parent=1 // pred_check_branch
      %384 = sbr.rel (0) target = $region45
    $region44: #{tpu_custom_call.1} parent=1 // pred_region
      %s386 = ssub.s32 256, 256
      %387 = vsyncadd [#allocation4], %s386
      %s388 = sshll.u32 [#allocation11], 4
      %s389 = int_to_ptr.vmem [resolvable:$true] %s388
      %394 = dma.vmem_to_hbm [thread:$0]  %s389, 256, %s5, [#allocation4], 128, 128, 8
    $region45: #{tpu_custom_call.1} parent=1 // pred_fallthru
      _
    // Predicated region
    $region46: #{tpu_custom_call.1} parent=1 // pred_check
      _
    $region47: #{tpu_custom_call.1} parent=1 // pred_check_branch
      %396 = sbr.rel (0) target = $region49
    $region48: #{tpu_custom_call.1} parent=1 // pred_region
      %397 = dma.done [#allocation4], 256
    $region49: #{tpu_custom_call.1} parent=1 // pred_fallthru
      _
    %398 = vsyncpa [#allocation3], 1
    %399 = vsyncpa [#allocation6], 1
    %400 = vsyncpa [#allocation9], 1
    %401 = vsyncpa [#allocation4], 1

// kernel: tpu_custom_call.1
$region0: #{tpu_custom_call.1}
  #allocation0 [shape = 'u32[]', space=smem, size = 0x4, offset = 0x4, fixed_abs, tag = 'smem constant byte address 0x4 - core index']
  #allocation1 [shape = 'u32[144,128]{1,0:T(1,128)}', space=vmem, size = 0x12000, scoped, tag = 'internal scratch']
  %s0 = inlined_call_operand.hbm [shape: f32[16,128], index: 0, kind: input, shape index: {}]
  %s1 = inlined_call_operand.hbm [shape: f32[3,128], index: 1, kind: input, shape index: {}]
  %s2 = inlined_call_operand.hbm [shape: f32[128,128], index: 2, kind: input, shape index: {}]
  %s3 = inlined_call_operand.hbm [shape: f32[128,128], index: 3, kind: input, shape index: {}]
  %s4 = inlined_call_operand.hbm [shape: f32[128,128], index: 4, kind: input, shape index: {}]
  %s5 = inlined_call_operand.hbm [shape: f32[16,128], index: 5, kind: output, shape index: {}]
  %s6 = sld [smem:[#allocation0]]
  $region50: #{tpu_custom_call.1} parent=0
    _
  %s8 = ssub.s32 1, %s6
  %s9 = scalar_select 0, %s8, %s6
  $region1: #{tpu_custom_call.1} parent=0
    #allocation2 [shape = 'u8[8192]{0}', space=vmem, size = 0x2000, scoped, tag = 'input window, operand 0, single buffered']
    #allocation3 [shape = 's32[1]{0}', space=sflag, size = 0x4, scoped, tag = 'scoped memory for tpu_custom_call.1']
    #allocation4 [shape = 's32[1]{0}', space=sflag, size = 0x4, scoped, tag = 'scoped memory for tpu_custom_call.1']
    #allocation5 [shape = 'u8[2048]{0}', space=vmem, size = 0x800, scoped, tag = 'input window, operand 1, single buffered']
    #allocation6 [shape = 's32[1]{0}', space=sflag, size = 0x4, scoped, tag = 'scoped memory for tpu_custom_call.1']
    #allocation7 [shape = 'u8[65536]{0}', space=vmem, size = 0x10000, scoped, tag = 'input window, operand 2, single buffered']
    #allocation8 [shape = 'u8[65536]{0}', space=vmem, size = 0x10000, scoped, tag = 'input window, operand 3, single buffered']
    #allocation9 [shape = 's32[1]{0}', space=sflag, size = 0x4, scoped, tag = 'scoped memory for tpu_custom_call.1']
    #allocation10 [shape = 'u8[65536]{0}', space=vmem, size = 0x10000, scoped, tag = 'input window, operand 4, single buffered']
    #allocation11 [shape = 'u8[8192]{0}', space=vmem, size = 0x2000, scoped, tag = 'output window, operand 0, single buffered']
    %10 = vsyncpa [#allocation3], 0
    %11 = vsyncpa [#allocation6], 0
    %12 = vsyncpa [#allocation9], 0
    %13 = vsyncpa [#allocation4], 0
    // Predicated region
    $region2: #{tpu_custom_call.1} parent=1 // pred_check
      _
    $region3: #{tpu_custom_call.1} parent=1 // pred_check_branch
      %15 = sbr.rel (0) target = $region5
    $region4: #{tpu_custom_call.1} parent=1 // pred_region
      %s17 = ssub.s32 256, 256
      %18 = vsyncadd [#allocation3], %s17
      %s19 = sshll.u32 [#allocation2], 4
      %s20 = int_to_ptr.vmem [resolvable:$true] %s19
      %25 = dma.hbm_to_vmem [thread:$0]  %s0, 256, %s20, [#allocation3], 128, 128, 8
    $region5: #{tpu_custom_call.1} parent=1 // pred_fallthru
      _
    // Predicated region
    $region6: #{tpu_custom_call.1} parent=1 // pred_check
      _
    $region7: #{tpu_custom_call.1} parent=1 // pred_check_branch
      %27 = sbr.rel (0) target = $region9
    $region8: #{tpu_custom_call.1} parent=1 // pred_region
      %s29 = ssub.s32 64, 64
      %30 = vsyncadd [#allocation6], %s29
      %s32 = sshll.u32 [#allocation5], 4
      %s33 = int_to_ptr.vmem [resolvable:$true] %s32
      %35 = dma.hbm_to_vmem [thread:$0]  %s1, 64, %s33, [#allocation6]
    $region9: #{tpu_custom_call.1} parent=1 // pred_fallthru
      _
    // Predicated region
    $region10: #{tpu_custom_call.1} parent=1 // pred_check
      _
    $region11: #{tpu_custom_call.1} parent=1 // pred_check_branch
      %37 = sbr.rel (0) target = $region13
    $region12: #{tpu_custom_call.1} parent=1 // pred_region
      %s39 = ssub.s32 2048, 2048
      %40 = vsyncadd [#allocation6], %s39
      %s41 = sshll.u32 [#allocation7], 4
      %s42 = int_to_ptr.vmem [resolvable:$true] %s41
      %47 = dma.hbm_to_vmem [thread:$0]  %s2, 2048, %s42, [#allocation6], 128, 128, 8
    $region13: #{tpu_custom_call.1} parent=1 // pred_fallthru
      _
    // Predicated region
    $region14: #{tpu_custom_call.1} parent=1 // pred_check
      _
    $region15: #{tpu_custom_call.1} parent=1 // pred_check_branch
      %49 = sbr.rel (0) target = $region17
    $region16: #{tpu_custom_call.1} parent=1 // pred_region
      %s51 = ssub.s32 2048, 2048
      %52 = vsyncadd [#allocation9], %s51
      %s53 = sshll.u32 [#allocation8], 4
      %s54 = int_to_ptr.vmem [resolvable:$true] %s53
      %59 = dma.hbm_to_vmem [thread:$0]  %s3, 2048, %s54, [#allocation9], 128, 128, 8
    $region17: #{tpu_custom_call.1} parent=1 // pred_fallthru
      _
    // Predicated region
    $region18: #{tpu_custom_call.1} parent=1 // pred_check
      _
    $region19: #{tpu_custom_call.1} parent=1 // pred_check_branch
      %61 = sbr.rel (0) target = $region21
    $region20: #{tpu_custom_call.1} parent=1 // pred_region
      %s63 = ssub.s32 2048, 2048
      %64 = vsyncadd [#allocation9], %s63
      %s65 = sshll.u32 [#allocation10], 4
      %s66 = int_to_ptr.vmem [resolvable:$true] %s65
      %71 = dma.hbm_to_vmem [thread:$0]  %s4, 2048, %s66, [#allocation9], 128, 128, 8
    $region21: #{tpu_custom_call.1} parent=1 // pred_fallthru
      _
    // Predicated region
    $region22: #{tpu_custom_call.1} parent=1 // pred_check
      _
    $region23: #{tpu_custom_call.1} parent=1 // pred_check_branch
      %73 = sbr.rel (0) target = $region25
    $region24: #{tpu_custom_call.1} parent=1 // pred_region
      %74 = dma.done [#allocation3], 256
    $region25: #{tpu_custom_call.1} parent=1 // pred_fallthru
      _
    // Predicated region
    $region26: #{tpu_custom_call.1} parent=1 // pred_check
      _
    $region27: #{tpu_custom_call.1} parent=1 // pred_check_branch
      %76 = sbr.rel (0) target = $region29
    $region28: #{tpu_custom_call.1} parent=1 // pred_region
      %77 = dma.done [#allocation6], 64
    $region29: #{tpu_custom_call.1} parent=1 // pred_fallthru
      _
    // Predicated region
    $region30: #{tpu_custom_call.1} parent=1 // pred_check
      _
    $region31: #{tpu_custom_call.1} parent=1 // pred_check_branch
      %79 = sbr.rel (0) target = $region33
    $region32: #{tpu_custom_call.1} parent=1 // pred_region
      %80 = dma.done [#allocation6], 2048
    $region33: #{tpu_custom_call.1} parent=1 // pred_fallthru
      _
    // Predicated region
    $region34: #{tpu_custom_call.1} parent=1 // pred_check
      _
    $region35: #{tpu_custom_call.1} parent=1 // pred_check_branch
      %82 = sbr.rel (0) target = $region37
    $region36: #{tpu_custom_call.1} parent=1 // pred_region
      %83 = dma.done [#allocation9], 2048
    $region37: #{tpu_custom_call.1} parent=1 // pred_fallthru
      _
    // Predicated region
    $region38: #{tpu_custom_call.1} parent=1 // pred_check
      _
    $region39: #{tpu_custom_call.1} parent=1 // pred_check_branch
      %85 = sbr.rel (0) target = $region41
    $region40: #{tpu_custom_call.1} parent=1 // pred_region
      %86 = dma.done [#allocation9], 2048
    $region41: #{tpu_custom_call.1} parent=1 // pred_fallthru
      _
    %v87 = vld [vmem:[#allocation2] sm:$0xff]
    %v88 = vld [vmem:[#allocation2 + $0x8] sm:$0xff]
    %v89 = vld [vmem:[#allocation7] sm:$0xff]
    %v90 = vld [vmem:[#allocation7 + $0x8] sm:$0xff]
    %v91 = vld [vmem:[#allocation7 + $0x10] sm:$0xff]
    %v92 = vld [vmem:[#allocation7 + $0x18] sm:$0xff]
    %v93 = vld [vmem:[#allocation7 + $0x20] sm:$0xff]
    %v94 = vld [vmem:[#allocation7 + $0x28] sm:$0xff]
    %v95 = vld [vmem:[#allocation7 + $0x30] sm:$0xff]
    %v96 = vld [vmem:[#allocation7 + $0x38] sm:$0xff]
    %v97 = vld [vmem:[#allocation7 + $0x40] sm:$0xff]
    %v98 = vld [vmem:[#allocation7 + $0x48] sm:$0xff]
    %v99 = vld [vmem:[#allocation7 + $0x50] sm:$0xff]
    %v100 = vld [vmem:[#allocation7 + $0x58] sm:$0xff]
    %v101 = vld [vmem:[#allocation7 + $0x60] sm:$0xff]
    %v102 = vld [vmem:[#allocation7 + $0x68] sm:$0xff]
    %v103 = vld [vmem:[#allocation7 + $0x70] sm:$0xff]
    %v104 = vld [vmem:[#allocation7 + $0x78] sm:$0xff]
    %v105 = vld [vmem:[#allocation5] sm:$0x1]
    %v106 = vlaneseq
    %v107 = vshrl.u32 %v106, 7
    %v108 = vsub.s32 0, %v107
    %v109 = vrot.slane %v105, %v108
    %110 = vmatprep.subr.mxu0 0.0
    %111 = vmatpush1.msra.mxu0 %v104
    %112 = vmatprep.subr.mxu0 0.0
    %113 = vmatpush1.msra.mxu0 %v103
    %114 = vmatprep.subr.mxu0 0.0
    %115 = vmatpush1.msra.mxu0 %v102
    %116 = vmatprep.subr.mxu0 0.0
    %117 = vmatpush1.msra.mxu0 %v101
    %118 = vmatprep.subr.mxu0 0.0
    %119 = vmatpush1.msra.mxu0 %v100
    %120 = vmatprep.subr.mxu0 0.0
    %121 = vmatpush1.msra.mxu0 %v99
    %122 = vmatprep.subr.mxu0 0.0
    %123 = vmatpush1.msra.mxu0 %v98
    %124 = vmatprep.subr.mxu0 0.0
    %125 = vmatpush1.msra.mxu0 %v97
    %126 = vmatprep.subr.mxu0 0.0
    %127 = vmatpush1.msra.mxu0 %v96
    %128 = vmatprep.subr.mxu0 0.0
    %129 = vmatpush1.msra.mxu0 %v95
    %130 = vmatprep.subr.mxu0 0.0
    %131 = vmatpush1.msra.mxu0 %v94
    %132 = vmatprep.subr.mxu0 0.0
    %133 = vmatpush1.msra.mxu0 %v93
    %134 = vmatprep.subr.mxu0 0.0
    %135 = vmatpush1.msra.mxu0 %v92
    %136 = vmatprep.subr.mxu0 0.0
    %137 = vmatpush1.msra.mxu0 %v91
    %138 = vmatprep.subr.mxu0 0.0
    %139 = vmatpush1.msra.mxu0 %v90
    %140 = vmatprep.subr.mxu0 0.0
    %141 = vmatpush1.msra.mxu0 %v89
    %142 = vmatprep.subr.mxu0 0.0
    %143 = vmatpush2.msra.mxu0 0.0
    %144 = vmatprep.subr.mxu0 0.0
    %145 = vmatpush2.msra.mxu0 0.0
    %146 = vmatprep.subr.mxu0 0.0
    %147 = vmatpush2.msra.mxu0 0.0
    %148 = vmatprep.subr.mxu0 0.0
    %149 = vmatpush2.msra.mxu0 0.0
    %150 = vmatprep.subr.mxu0 0.0
    %151 = vmatpush2.msra.mxu0 0.0
    %152 = vmatprep.subr.mxu0 0.0
    %153 = vmatpush2.msra.mxu0 0.0
    %154 = vmatprep.subr.mxu0 0.0
    %155 = vmatpush2.msra.mxu0 0.0
    %156 = vmatprep.subr.mxu0 0.0
    %157 = vmatpush2.msra.mxu0 0.0
    %158 = vmatprep.subr.mxu0 0.0
    %159 = vmatpush2.msra.mxu0 0.0
    %160 = vmatprep.subr.mxu0 0.0
    %161 = vmatpush2.msra.mxu0 0.0
    %162 = vmatprep.subr.mxu0 0.0
    %163 = vmatpush2.msra.mxu0 0.0
    %164 = vmatprep.subr.mxu0 0.0
    %165 = vmatpush2.msra.mxu0 0.0
    %166 = vmatprep.subr.mxu0 0.0
    %167 = vmatpush2.msra.mxu0 0.0
    %168 = vmatprep.subr.mxu0 0.0
    %169 = vmatpush2.msra.mxu0 0.0
    %170 = vmatprep.subr.mxu0 0.0
    %171 = vmatpush2.msra.mxu0 0.0
    %172 = vmatprep.subr.mxu0 0.0
    %173 = vmatpush2.msra.mxu0 0.0
    %174 = vmatprep.mubr.f32.mxu0 0.0
    %175 = vmatmul.mubr.f32.gmra.mxu0 %v87
    %v176 = vpop.f32.mrf.mxu0
    %v177 = vadd.f32 %v109, %v176
    %v178 = vpop.f32.mrf.mxu0
    %179 = vmatprep.mubr.f32.mxu0 0.0
    %180 = vmatmul.mubr.f32.gmra.mxu0 %v88
    %v181 = vpop.f32.mrf.mxu0
    %v182 = vadd.f32 %v109, %v181
    %v183 = vpop.f32.mrf.mxu0
    %184 = vdwg.mxu0
    %v185 = vmax.f32 %v177, 0.0
    %v186 = vmax.f32 %v182, 0.0
    %v187 = vld [vmem:[#allocation8] sm:$0xff]
    %v188 = vld [vmem:[#allocation8 + $0x8] sm:$0xff]
    %v189 = vld [vmem:[#allocation8 + $0x10] sm:$0xff]
    %v190 = vld [vmem:[#allocation8 + $0x18] sm:$0xff]
    %v191 = vld [vmem:[#allocation8 + $0x20] sm:$0xff]
    %v192 = vld [vmem:[#allocation8 + $0x28] sm:$0xff]
    %v193 = vld [vmem:[#allocation8 + $0x30] sm:$0xff]
    %v194 = vld [vmem:[#allocation8 + $0x38] sm:$0xff]
    %v195 = vld [vmem:[#allocation8 + $0x40] sm:$0xff]
    %v196 = vld [vmem:[#allocation8 + $0x48] sm:$0xff]
    %v197 = vld [vmem:[#allocation8 + $0x50] sm:$0xff]
    %v198 = vld [vmem:[#allocation8 + $0x58] sm:$0xff]
    %v199 = vld [vmem:[#allocation8 + $0x60] sm:$0xff]
    %v200 = vld [vmem:[#allocation8 + $0x68] sm:$0xff]
    %v201 = vld [vmem:[#allocation8 + $0x70] sm:$0xff]
    %v202 = vld [vmem:[#allocation8 + $0x78] sm:$0xff]
    %v203 = vld [vmem:[#allocation5 + $0x1] sm:$0x1]
    %v204 = vlaneseq
    %v205 = vshrl.u32 %v204, 7
    %v206 = vsub.s32 0, %v205
    %v207 = vrot.slane %v203, %v206
    %208 = vmatprep.subr.mxu0 0.0
    %209 = vmatpush1.msra.mxu0 %v202
    %210 = vmatprep.subr.mxu0 0.0
    %211 = vmatpush1.msra.mxu0 %v201
    %212 = vmatprep.subr.mxu0 0.0
    %213 = vmatpush1.msra.mxu0 %v200
    %214 = vmatprep.subr.mxu0 0.0
    %215 = vmatpush1.msra.mxu0 %v199
    %216 = vmatprep.subr.mxu0 0.0
    %217 = vmatpush1.msra.mxu0 %v198
    %218 = vmatprep.subr.mxu0 0.0
    %219 = vmatpush1.msra.mxu0 %v197
    %220 = vmatprep.subr.mxu0 0.0
    %221 = vmatpush1.msra.mxu0 %v196
    %222 = vmatprep.subr.mxu0 0.0
    %223 = vmatpush1.msra.mxu0 %v195
    %224 = vmatprep.subr.mxu0 0.0
    %225 = vmatpush1.msra.mxu0 %v194
    %226 = vmatprep.subr.mxu0 0.0
    %227 = vmatpush1.msra.mxu0 %v193
    %228 = vmatprep.subr.mxu0 0.0
    %229 = vmatpush1.msra.mxu0 %v192
    %230 = vmatprep.subr.mxu0 0.0
    %231 = vmatpush1.msra.mxu0 %v191
    %232 = vmatprep.subr.mxu0 0.0
    %233 = vmatpush1.msra.mxu0 %v190
    %234 = vmatprep.subr.mxu0 0.0
    %235 = vmatpush1.msra.mxu0 %v189
    %236 = vmatprep.subr.mxu0 0.0
    %237 = vmatpush1.msra.mxu0 %v188
    %238 = vmatprep.subr.mxu0 0.0
    %239 = vmatpush1.msra.mxu0 %v187
    %240 = vmatprep.subr.mxu0 0.0
    %241 = vmatpush2.msra.mxu0 0.0
    %242 = vmatprep.subr.mxu0 0.0
    %243 = vmatpush2.msra.mxu0 0.0
    %244 = vmatprep.subr.mxu0 0.0
    %245 = vmatpush2.msra.mxu0 0.0
    %246 = vmatprep.subr.mxu0 0.0
    %247 = vmatpush2.msra.mxu0 0.0
    %248 = vmatprep.subr.mxu0 0.0
    %249 = vmatpush2.msra.mxu0 0.0
    %250 = vmatprep.subr.mxu0 0.0
    %251 = vmatpush2.msra.mxu0 0.0
    %252 = vmatprep.subr.mxu0 0.0
    %253 = vmatpush2.msra.mxu0 0.0
    %254 = vmatprep.subr.mxu0 0.0
    %255 = vmatpush2.msra.mxu0 0.0
    %256 = vmatprep.subr.mxu0 0.0
    %257 = vmatpush2.msra.mxu0 0.0
    %258 = vmatprep.subr.mxu0 0.0
    %259 = vmatpush2.msra.mxu0 0.0
    %260 = vmatprep.subr.mxu0 0.0
    %261 = vmatpush2.msra.mxu0 0.0
    %262 = vmatprep.subr.mxu0 0.0
    %263 = vmatpush2.msra.mxu0 0.0
    %264 = vmatprep.subr.mxu0 0.0
    %265 = vmatpush2.msra.mxu0 0.0
    %266 = vmatprep.subr.mxu0 0.0
    %267 = vmatpush2.msra.mxu0 0.0
    %268 = vmatprep.subr.mxu0 0.0
    %269 = vmatpush2.msra.mxu0 0.0
    %270 = vmatprep.subr.mxu0 0.0
    %271 = vmatpush2.msra.mxu0 0.0
    %272 = vmatprep.mubr.f32.mxu0 0.0
    %273 = vmatmul.mubr.f32.gmra.mxu0 %v185
    %v274 = vpop.f32.mrf.mxu0
    %v275 = vadd.f32 %v207, %v274
    %v276 = vpop.f32.mrf.mxu0
    %277 = vmatprep.mubr.f32.mxu0 0.0
    %278 = vmatmul.mubr.f32.gmra.mxu0 %v186
    %v279 = vpop.f32.mrf.mxu0
    %v280 = vadd.f32 %v207, %v279
    %v281 = vpop.f32.mrf.mxu0
    %282 = vdwg.mxu0
    %v283 = vmax.f32 %v275, 0.0
    %v284 = vmax.f32 %v280, 0.0
    %v285 = vld [vmem:[#allocation10] sm:$0xff]
    %v286 = vld [vmem:[#allocation10 + $0x8] sm:$0xff]
    %v287 = vld [vmem:[#allocation10 + $0x10] sm:$0xff]
    %v288 = vld [vmem:[#allocation10 + $0x18] sm:$0xff]
    %v289 = vld [vmem:[#allocation10 + $0x20] sm:$0xff]
    %v290 = vld [vmem:[#allocation10 + $0x28] sm:$0xff]
    %v291 = vld [vmem:[#allocation10 + $0x30] sm:$0xff]
    %v292 = vld [vmem:[#allocation10 + $0x38] sm:$0xff]
    %v293 = vld [vmem:[#allocation10 + $0x40] sm:$0xff]
    %v294 = vld [vmem:[#allocation10 + $0x48] sm:$0xff]
    %v295 = vld [vmem:[#allocation10 + $0x50] sm:$0xff]
    %v296 = vld [vmem:[#allocation10 + $0x58] sm:$0xff]
    %v297 = vld [vmem:[#allocation10 + $0x60] sm:$0xff]
    %v298 = vld [vmem:[#allocation10 + $0x68] sm:$0xff]
    %v299 = vld [vmem:[#allocation10 + $0x70] sm:$0xff]
    %v300 = vld [vmem:[#allocation10 + $0x78] sm:$0xff]
    %v301 = vld [vmem:[#allocation5 + $0x2] sm:$0x1]
    %v302 = vlaneseq
    %v303 = vshrl.u32 %v302, 7
    %v304 = vsub.s32 0, %v303
    %v305 = vrot.slane %v301, %v304
    %306 = vmatprep.subr.mxu0 0.0
    %307 = vmatpush1.msra.mxu0 %v300
    %308 = vmatprep.subr.mxu0 0.0
    %309 = vmatpush1.msra.mxu0 %v299
    %310 = vmatprep.subr.mxu0 0.0
    %311 = vmatpush1.msra.mxu0 %v298
    %312 = vmatprep.subr.mxu0 0.0
    %313 = vmatpush1.msra.mxu0 %v297
    %314 = vmatprep.subr.mxu0 0.0
    %315 = vmatpush1.msra.mxu0 %v296
    %316 = vmatprep.subr.mxu0 0.0
    %317 = vmatpush1.msra.mxu0 %v295
    %318 = vmatprep.subr.mxu0 0.0
    %319 = vmatpush1.msra.mxu0 %v294
    %320 = vmatprep.subr.mxu0 0.0
    %321 = vmatpush1.msra.mxu0 %v293
    %322 = vmatprep.subr.mxu0 0.0
    %323 = vmatpush1.msra.mxu0 %v292
    %324 = vmatprep.subr.mxu0 0.0
    %325 = vmatpush1.msra.mxu0 %v291
    %326 = vmatprep.subr.mxu0 0.0
    %327 = vmatpush1.msra.mxu0 %v290
    %328 = vmatprep.subr.mxu0 0.0
    %329 = vmatpush1.msra.mxu0 %v289
    %330 = vmatprep.subr.mxu0 0.0
    %331 = vmatpush1.msra.mxu0 %v288
    %332 = vmatprep.subr.mxu0 0.0
    %333 = vmatpush1.msra.mxu0 %v287
    %334 = vmatprep.subr.mxu0 0.0
    %335 = vmatpush1.msra.mxu0 %v286
    %336 = vmatprep.subr.mxu0 0.0
    %337 = vmatpush1.msra.mxu0 %v285
    %338 = vmatprep.subr.mxu0 0.0
    %339 = vmatpush2.msra.mxu0 0.0
    %340 = vmatprep.subr.mxu0 0.0
    %341 = vmatpush2.msra.mxu0 0.0
    %342 = vmatprep.subr.mxu0 0.0
    %343 = vmatpush2.msra.mxu0 0.0
    %344 = vmatprep.subr.mxu0 0.0
    %345 = vmatpush2.msra.mxu0 0.0
    %346 = vmatprep.subr.mxu0 0.0
    %347 = vmatpush2.msra.mxu0 0.0
    %348 = vmatprep.subr.mxu0 0.0
    %349 = vmatpush2.msra.mxu0 0.0
    %350 = vmatprep.subr.mxu0 0.0
    %351 = vmatpush2.msra.mxu0 0.0
    %352 = vmatprep.subr.mxu0 0.0
    %353 = vmatpush2.msra.mxu0 0.0
    %354 = vmatprep.subr.mxu0 0.0
    %355 = vmatpush2.msra.mxu0 0.0
    %356 = vmatprep.subr.mxu0 0.0
    %357 = vmatpush2.msra.mxu0 0.0
    %358 = vmatprep.subr.mxu0 0.0
    %359 = vmatpush2.msra.mxu0 0.0
    %360 = vmatprep.subr.mxu0 0.0
    %361 = vmatpush2.msra.mxu0 0.0
    %362 = vmatprep.subr.mxu0 0.0
    %363 = vmatpush2.msra.mxu0 0.0
    %364 = vmatprep.subr.mxu0 0.0
    %365 = vmatpush2.msra.mxu0 0.0
    %366 = vmatprep.subr.mxu0 0.0
    %367 = vmatpush2.msra.mxu0 0.0
    %368 = vmatprep.subr.mxu0 0.0
    %369 = vmatpush2.msra.mxu0 0.0
    %370 = vmatprep.mubr.f32.mxu0 0.0
    %371 = vmatmul.mubr.f32.gmra.mxu0 %v283
    %v372 = vpop.f32.mrf.mxu0
    %v373 = vadd.f32 %v305, %v372
    %v374 = vpop.f32.mrf.mxu0
    %375 = vmatprep.mubr.f32.mxu0 0.0
    %376 = vmatmul.mubr.f32.gmra.mxu0 %v284
    %v377 = vpop.f32.mrf.mxu0
    %v378 = vadd.f32 %v305, %v377
    %v379 = vpop.f32.mrf.mxu0
    %380 = vdwg.mxu0
    %381 = vst [vmem:[#allocation11] sm:$0xff] %v373
    %382 = vst [vmem:[#allocation11 + $0x8] sm:$0xff] %v378
    // Predicated region
    $region42: #{tpu_custom_call.1} parent=1 // pred_check
      _
    $region43: #{tpu_custom_call.1} parent=1 // pred_check_branch
      %384 = sbr.rel (0) target = $region45
    $region44: #{tpu_custom_call.1} parent=1 // pred_region
      %s386 = ssub.s32 256, 256
      %387 = vsyncadd [#allocation4], %s386
      %s388 = sshll.u32 [#allocation11], 4
      %s389 = int_to_ptr.vmem [resolvable:$true] %s388
      %394 = dma.vmem_to_hbm [thread:$0]  %s389, 256, %s5, [#allocation4], 128, 128, 8
    $region45: #{tpu_custom_call.1} parent=1 // pred_fallthru
      _
    // Predicated region
    $region46: #{tpu_custom_call.1} parent=1 // pred_check
      _
    $region47: #{tpu_custom_call.1} parent=1 // pred_check_branch
      %396 = sbr.rel (0) target = $region49
    $region48: #{tpu_custom_call.1} parent=1 // pred_region
      %397 = dma.done [#allocation4], 256
    $region49: #{tpu_custom_call.1} parent=1 // pred_fallthru
      _
    %398 = vsyncpa [#allocation3], 1
    %399 = vsyncpa [#allocation6], 1
    %400 = vsyncpa [#allocation9], 1
    %401 = vsyncpa [#allocation4], 1

</llo_original>
